<compile_context>
chip_gen: v6e
topology: v6e:2x2x1
jax: 0.10.0
libtpu: 0.0.40
codegen_flags: <defaults>
</compile_context>

<pallas_src>
import functools
from collections import namedtuple

import jax
import jax.numpy as jnp
from jax import lax
from jax.experimental import pallas as pl
from jax.experimental.pallas import tpu as pltpu

LossTuple = namedtuple(
    "LossTuple",
    ["rpn_loc_loss", "rpn_cls_loss", "roi_loc_loss", "roi_cls_loss", "total_loss"],
)


# ----------------------------------------------------------------------------
# In-kernel helpers (pure jnp on VMEM-resident values)
# ----------------------------------------------------------------------------
def _smooth_l1_sum(diff, sigma2):
    """Sum of smooth-L1 terms; masked-out entries have diff==0 -> contribute 0."""
    abs_diff = jnp.abs(diff)
    flag = (abs_diff < (1.0 / sigma2)).astype(jnp.float32)
    y = flag * (0.5 * sigma2) * diff * diff + (1.0 - flag) * (abs_diff - 0.5 / sigma2)
    return jnp.sum(y)


def _masked_ce(scores_t, labels_row):
    """Mean cross-entropy with ignore_index == -1.

    scores_t   : (C, N) f32 logits (classes on sublanes, N lane-dense)
    labels_row : (1, N) i32
    """
    m = jnp.max(scores_t, axis=0, keepdims=True)                        # (1, N)
    lse = m + jnp.log(jnp.sum(jnp.exp(scores_t - m), axis=0, keepdims=True))
    cls = lax.broadcasted_iota(jnp.int32, scores_t.shape, 0)
    onehot = (cls == labels_row).astype(jnp.float32)
    picked = jnp.sum(onehot * scores_t, axis=0, keepdims=True)          # (1, N)
    valid = (labels_row >= 0).astype(jnp.float32)
    loss_sum = jnp.sum((lse - picked) * valid)
    count = jnp.sum(valid)
    return loss_sum / jnp.maximum(count, 1.0)


# ----------------------------------------------------------------------------
# Fused Pallas kernel: all 4 losses + total in one launch
# ----------------------------------------------------------------------------
def _fused_loss_kernel(
    rpn_loc_ref,      # (4, K)          f32
    gt_rpn_loc_ref,   # (4, K)          f32
    rpn_label_ref,    # (1, K)          i32   (-1 / 0 / 1)
    rpn_score_ref,    # (2, K)          f32
    roi_cls_loc_ref,  # (n_class*4, S)  f32
    gt_roi_loc_ref,   # (4, S)          f32
    roi_label_ref,    # (1, S)          i32   ([0, n_class))
    roi_score_ref,    # (n_class, S)    f32
    out_ref,          # (5,)            f32   SMEM
    *, rpn_sigma, roi_sigma,
):
    # ---- RPN localization loss ------------------------------------------
    rpn_label = rpn_label_ref[...]                                      # (1, K)
    rpn_pos = (rpn_label > 0).astype(jnp.float32)
    rpn_diff = rpn_pos * (rpn_loc_ref[...] - gt_rpn_loc_ref[...])       # (4, K)
    rpn_norm = jnp.sum((rpn_label >= 0).astype(jnp.float32))
    rpn_loc_loss = _smooth_l1_sum(rpn_diff, rpn_sigma * rpn_sigma) / jnp.maximum(
        rpn_norm, 1.0
    )

    # ---- RPN classification loss (ignore_index = -1) ---------------------
    rpn_cls_loss = _masked_ce(rpn_score_ref[...], rpn_label)

    # ---- ROI localization loss — in-kernel class gather via masking ------
    roi_label = roi_label_ref[...]                                      # (1, S)
    pred = roi_cls_loc_ref[...]                                         # (n_class*4, S)
    row = lax.broadcasted_iota(jnp.int32, pred.shape, 0)
    cls_of_row = lax.shift_right_logical(row, 2)                        # row // 4
    coord_of_row = jnp.bitwise_and(row, 3)                              # row % 4
    class_mask = (cls_of_row == roi_label).astype(jnp.float32)

    gt_rows = gt_roi_loc_ref[...]                                       # (4, S)
    gt_tiled = jnp.zeros_like(pred)
    for j in range(4):                                                  # static unroll
        gt_tiled = gt_tiled + (coord_of_row == j).astype(jnp.float32) * gt_rows[j:j + 1, :]

    roi_pos = (roi_label > 0).astype(jnp.float32)
    roi_diff = class_mask * roi_pos * (pred - gt_tiled)
    roi_norm = jnp.sum((roi_label >= 0).astype(jnp.float32))
    roi_loc_loss = _smooth_l1_sum(roi_diff, roi_sigma * roi_sigma) / jnp.maximum(
        roi_norm, 1.0
    )

    # ---- ROI classification loss -----------------------------------------
    roi_cls_loss = _masked_ce(roi_score_ref[...], roi_label)

    # ---- scalar outputs (SMEM) --------------------------------------------
    out_ref[0] = rpn_loc_loss
    out_ref[1] = rpn_cls_loss
    out_ref[2] = roi_loc_loss
    out_ref[3] = roi_cls_loss
    out_ref[4] = rpn_loc_loss + rpn_cls_loss + roi_loc_loss + roi_cls_loss


# ----------------------------------------------------------------------------
# FasterRCNNTrainer.forward loss head (batch size 1 semantics)
# ----------------------------------------------------------------------------
@functools.partial(jax.jit, static_argnames=("rpn_sigma", "roi_sigma"))
def faster_rcnn_trainer_forward(
    rpn_loc,        # (K, 4)  RPN box regression output, batch index 0
    rpn_score,      # (K, 2)  RPN fg/bg logits, batch index 0
    gt_rpn_loc,     # (K, 4)  AnchorTargetCreator regression targets
    gt_rpn_label,   # (K,)    in {-1, 0, 1}
    roi_cls_loc,    # (S, n_class*4) head box regression output
    roi_score,      # (S, n_class)   head class logits
    gt_roi_loc,     # (S, 4)  ProposalTargetCreator regression targets
    gt_roi_label,   # (S,)    in [0, n_class)
    rpn_sigma=3.0,
    roi_sigma=1.0,
):
    K = rpn_loc.shape[0]
    S = roi_score.shape[0]

    # Lane-dense layout plumbing (N on the lane axis); fused by XLA under jit.
    args = (
        rpn_loc.astype(jnp.float32).T,                       # (4, K)
        gt_rpn_loc.astype(jnp.float32).T,                    # (4, K)
        gt_rpn_label.astype(jnp.int32).reshape(1, K),        # (1, K)
        rpn_score.astype(jnp.float32).T,                     # (2, K)
        roi_cls_loc.astype(jnp.float32).T,                   # (n_class*4, S)
        gt_roi_loc.astype(jnp.float32).T,                    # (4, S)
        gt_roi_label.astype(jnp.int32).reshape(1, S),        # (1, S)
        roi_score.astype(jnp.float32).T,                     # (n_class, S)
    )

    losses = pl.pallas_call(
        functools.partial(
            _fused_loss_kernel,
            rpn_sigma=float(rpn_sigma),
            roi_sigma=float(roi_sigma),
        ),
        out_shape=jax.ShapeDtypeStruct((5,), jnp.float32),
        in_specs=[pl.BlockSpec(memory_space=pltpu.MemorySpace.VMEM)] * 8,
        out_specs=pl.BlockSpec(memory_space=pltpu.MemorySpace.SMEM),
    )(*args)

    return LossTuple(losses[0], losses[1], losses[2], losses[3], losses[4])


# ----------------------------------------------------------------------------
# Pure-JAX reference (for sanity checking the fused kernel)
# ----------------------------------------------------------------------------
def _reference_losses(rpn_loc, rpn_score, gt_rpn_loc, gt_rpn_label,
                      roi_cls_loc, roi_score, gt_roi_loc, gt_roi_label,
                      rpn_sigma, roi_sigma):
    def loc_loss(pred, gt, label, sigma):
        sigma2 = sigma * sigma
        in_w = (label > 0).astype(jnp.float32)[:, None]
        diff = in_w * (pred - gt)
        ad = jnp.abs(diff)
        flag = (ad < 1.0 / sigma2).astype(jnp.float32)
        y = flag * (sigma2 / 2.0) * diff * diff + (1.0 - flag) * (ad - 0.5 / sigma2)
        return jnp.sum(y) / jnp.maximum(
            jnp.sum((label >= 0).astype(jnp.float32)), 1.0)

    def ce(scores, labels):
        logp = jax.nn.log_softmax(scores, axis=-1)
        picked = jnp.take_along_axis(
            logp, jnp.maximum(labels, 0)[:, None], axis=1)[:, 0]
        valid = (labels >= 0).astype(jnp.float32)
        return -jnp.sum(picked * valid) / jnp.maximum(jnp.sum(valid), 1.0)

    rll = loc_loss(rpn_loc, gt_rpn_loc, gt_rpn_label, rpn_sigma)
    rcl = ce(rpn_score, gt_rpn_label)
    S = roi_cls_loc.shape[0]
    roi_loc = jnp.take_along_axis(
        roi_cls_loc.reshape(S, -1, 4),
        gt_roi_label.reshape(S, 1, 1).astype(jnp.int32), axis=1)[:, 0, :]
    oll = loc_loss(roi_loc, gt_roi_loc, gt_roi_label, roi_sigma)
    ocl = ce(roi_score, gt_roi_label)
    return jnp.stack([rll, rcl, oll, ocl, rll + rcl + oll + ocl])


# ----------------------------------------------------------------------------
# Demo
# ----------------------------------------------------------------------------
if __name__ == "__main__":
    key = jax.random.PRNGKey(0)
    ks = jax.random.split(key, 8)

    # Synthetic stand-ins for the outputs of the external sub-modules.
    # "image" 16x16, feature map 8x8, A=4 anchors -> K = 256 anchors.
    K = 8 * 8 * 4
    S = 64           # sampled ROIs
    n_class = 8      # including background

    rpn_loc = jax.random.normal(ks[0], (K, 4), jnp.float32)
    rpn_score = jax.random.normal(ks[1], (K, 2), jnp.float32)
    gt_rpn_loc = jax.random.normal(ks[2], (K, 4), jnp.float32)
    gt_rpn_label = jax.random.randint(ks[3], (K,), -1, 2, jnp.int32)

    roi_cls_loc = jax.random.normal(ks[4], (S, n_class * 4), jnp.float32)
    roi_score = jax.random.normal(ks[5], (S, n_class), jnp.float32)
    gt_roi_loc = jax.random.normal(ks[6], (S, 4), jnp.float32)
    gt_roi_label = jax.random.randint(ks[7], (S,), 0, n_class, jnp.int32)

    losses = faster_rcnn_trainer_forward(
        rpn_loc, rpn_score, gt_rpn_loc, gt_rpn_label,
        roi_cls_loc, roi_score, gt_roi_loc, gt_roi_label,
        rpn_sigma=3.0, roi_sigma=1.0,
    )
    jax.block_until_ready(losses.total_loss)

    got = jnp.stack([losses.rpn_loc_loss, losses.rpn_cls_loss,
                     losses.roi_loc_loss, losses.roi_cls_loss, losses.total_loss])
    want = _reference_losses(
        rpn_loc, rpn_score, gt_rpn_loc, gt_rpn_label,
        roi_cls_loc, roi_score, gt_roi_loc, gt_roi_label, 3.0, 1.0)

    assert bool(jnp.all(jnp.isfinite(got))), "non-finite loss"
    assert bool(jnp.allclose(got, want, rtol=1e-3, atol=1e-4)), (got, want)
    print("KERNEL_OK")
</pallas_src>

<mosaic_0001>
module attributes {stable_mosaic.version = 11 : i64} {
  func.func @_fused_loss_kernel(%arg0: memref<4x256xf32, #tpu.memory_space<vmem>>, %arg1: memref<4x256xf32, #tpu.memory_space<vmem>>, %arg2: memref<1x256xi32, #tpu.memory_space<vmem>>, %arg3: memref<2x256xf32, #tpu.memory_space<vmem>>, %arg4: memref<32x64xf32, #tpu.memory_space<vmem>>, %arg5: memref<4x64xf32, #tpu.memory_space<vmem>>, %arg6: memref<1x64xi32, #tpu.memory_space<vmem>>, %arg7: memref<8x64xf32, #tpu.memory_space<vmem>>, %arg8: memref<5xf32, #tpu.memory_space<smem>>) attributes {dimension_semantics = [], scalar_prefetch = 0 : i64, scratch_operands = 0 : i64, tpu.core_type = #tpu.core_type<tc>} {
    %c0 = arith.constant 0 : index
    %c0_0 = arith.constant 0 : index
    %0 = vector.load %arg2[%c0, %c0_0] : memref<1x256xi32, #tpu.memory_space<vmem>>, vector<1x256xi32>
    %c0_i32 = arith.constant 0 : i32
    %1 = vector.broadcast %c0_i32 : i32 to vector<1x256xi32>
    %2 = arith.cmpi sgt, %0, %1 : vector<1x256xi32>
    %3 = arith.extui %2 : vector<1x256xi1> to vector<1x256xi32>
    %4 = arith.sitofp %3 : vector<1x256xi32> to vector<1x256xf32>
    %c0_1 = arith.constant 0 : index
    %c0_2 = arith.constant 0 : index
    %5 = vector.load %arg0[%c0_1, %c0_2] : memref<4x256xf32, #tpu.memory_space<vmem>>, vector<4x256xf32>
    %c0_3 = arith.constant 0 : index
    %c0_4 = arith.constant 0 : index
    %6 = vector.load %arg1[%c0_3, %c0_4] : memref<4x256xf32, #tpu.memory_space<vmem>>, vector<4x256xf32>
    %7 = arith.subf %5, %6 : vector<4x256xf32>
    %8 = vector.broadcast %4 : vector<1x256xf32> to vector<4x256xf32>
    %9 = arith.mulf %8, %7 : vector<4x256xf32>
    %c0_i32_5 = arith.constant 0 : i32
    %10 = vector.broadcast %c0_i32_5 : i32 to vector<1x256xi32>
    %11 = arith.cmpi sge, %0, %10 : vector<1x256xi32>
    %12 = arith.extui %11 : vector<1x256xi1> to vector<1x256xi32>
    %13 = arith.sitofp %12 : vector<1x256xi32> to vector<1x256xf32>
    %14 = vector.shape_cast %13 : vector<1x256xf32> to vector<1x1x256xf32>
    %cst = arith.constant dense<0.000000e+00> : vector<1xf32>
    %15 = vector.multi_reduction <add>, %14, %cst [1, 2] : vector<1x1x256xf32> to vector<1xf32>
    %16 = vector.shape_cast %15 : vector<1xf32> to vector<1x1x1xf32>
    %17 = vector.extract %16[0, 0, 0] : f32 from vector<1x1x1xf32>
    %18 = math.absf %9 : vector<4x256xf32>
    %cst_6 = arith.constant 0.111111112 : f32
    %19 = vector.broadcast %cst_6 : f32 to vector<4x256xf32>
    %20 = arith.cmpf olt, %18, %19 : vector<4x256xf32>
    %21 = arith.extui %20 : vector<4x256xi1> to vector<4x256xi32>
    %22 = arith.sitofp %21 : vector<4x256xi32> to vector<4x256xf32>
    %cst_7 = arith.constant 4.500000e+00 : f32
    %23 = vector.broadcast %cst_7 : f32 to vector<4x256xf32>
    %24 = arith.mulf %22, %23 : vector<4x256xf32>
    %25 = arith.mulf %24, %9 : vector<4x256xf32>
    %26 = arith.mulf %25, %9 : vector<4x256xf32>
    %cst_8 = arith.constant 1.000000e+00 : f32
    %27 = vector.broadcast %cst_8 : f32 to vector<4x256xf32>
    %28 = arith.subf %27, %22 : vector<4x256xf32>
    %cst_9 = arith.constant 0.055555556 : f32
    %29 = vector.broadcast %cst_9 : f32 to vector<4x256xf32>
    %30 = arith.subf %18, %29 : vector<4x256xf32>
    %31 = arith.mulf %28, %30 : vector<4x256xf32>
    %32 = arith.addf %26, %31 : vector<4x256xf32>
    %33 = vector.shape_cast %32 : vector<4x256xf32> to vector<1x4x256xf32>
    %cst_10 = arith.constant dense<0.000000e+00> : vector<1xf32>
    %34 = vector.multi_reduction <add>, %33, %cst_10 [1, 2] : vector<1x4x256xf32> to vector<1xf32>
    %35 = vector.shape_cast %34 : vector<1xf32> to vector<1x1x1xf32>
    %36 = vector.extract %35[0, 0, 0] : f32 from vector<1x1x1xf32>
    %cst_11 = arith.constant 1.000000e+00 : f32
    %37 = arith.maximumf %17, %cst_11 : f32
    %38 = arith.divf %36, %37 : f32
    %c0_12 = arith.constant 0 : index
    %c0_13 = arith.constant 0 : index
    %39 = vector.load %arg3[%c0_12, %c0_13] : memref<2x256xf32, #tpu.memory_space<vmem>>, vector<2x256xf32>
    %cst_14 = arith.constant dense<0xFF800000> : vector<256xf32>
    %40 = vector.multi_reduction <maximumf>, %39, %cst_14 [0] : vector<2x256xf32> to vector<256xf32>
    %41 = vector.shape_cast %40 : vector<256xf32> to vector<1x256xf32>
    %42 = vector.broadcast %41 : vector<1x256xf32> to vector<2x256xf32>
    %43 = arith.subf %39, %42 : vector<2x256xf32>
    %44 = math.exp %43 : vector<2x256xf32>
    %cst_15 = arith.constant dense<0.000000e+00> : vector<256xf32>
    %45 = vector.multi_reduction <add>, %44, %cst_15 [0] : vector<2x256xf32> to vector<256xf32>
    %46 = vector.shape_cast %45 : vector<256xf32> to vector<1x256xf32>
    %47 = math.log %46 : vector<1x256xf32>
    %48 = arith.addf %41, %47 : vector<1x256xf32>
    %49 = tpu.iota {dimensions = array<i32: 0>} : vector<2x256xi32>
    %50 = vector.broadcast %0 : vector<1x256xi32> to vector<2x256xi32>
    %51 = arith.cmpi eq, %49, %50 : vector<2x256xi32>
    %52 = arith.extui %51 : vector<2x256xi1> to vector<2x256xi32>
    %53 = arith.sitofp %52 : vector<2x256xi32> to vector<2x256xf32>
    %54 = arith.mulf %53, %39 : vector<2x256xf32>
    %cst_16 = arith.constant dense<0.000000e+00> : vector<256xf32>
    %55 = vector.multi_reduction <add>, %54, %cst_16 [0] : vector<2x256xf32> to vector<256xf32>
    %56 = vector.shape_cast %55 : vector<256xf32> to vector<1x256xf32>
    %c0_i32_17 = arith.constant 0 : i32
    %57 = vector.broadcast %c0_i32_17 : i32 to vector<1x256xi32>
    %58 = arith.cmpi sge, %0, %57 : vector<1x256xi32>
    %59 = arith.extui %58 : vector<1x256xi1> to vector<1x256xi32>
    %60 = arith.sitofp %59 : vector<1x256xi32> to vector<1x256xf32>
    %61 = arith.subf %48, %56 : vector<1x256xf32>
    %62 = arith.mulf %61, %60 : vector<1x256xf32>
    %63 = vector.shape_cast %62 : vector<1x256xf32> to vector<1x1x256xf32>
    %cst_18 = arith.constant dense<0.000000e+00> : vector<1xf32>
    %64 = vector.multi_reduction <add>, %63, %cst_18 [1, 2] : vector<1x1x256xf32> to vector<1xf32>
    %65 = vector.shape_cast %64 : vector<1xf32> to vector<1x1x1xf32>
    %66 = vector.extract %65[0, 0, 0] : f32 from vector<1x1x1xf32>
    %67 = vector.shape_cast %60 : vector<1x256xf32> to vector<1x1x256xf32>
    %cst_19 = arith.constant dense<0.000000e+00> : vector<1xf32>
    %68 = vector.multi_reduction <add>, %67, %cst_19 [1, 2] : vector<1x1x256xf32> to vector<1xf32>
    %69 = vector.shape_cast %68 : vector<1xf32> to vector<1x1x1xf32>
    %70 = vector.extract %69[0, 0, 0] : f32 from vector<1x1x1xf32>
    %cst_20 = arith.constant 1.000000e+00 : f32
    %71 = arith.maximumf %70, %cst_20 : f32
    %72 = arith.divf %66, %71 : f32
    %c0_21 = arith.constant 0 : index
    %c0_22 = arith.constant 0 : index
    %73 = vector.load %arg6[%c0_21, %c0_22] : memref<1x64xi32, #tpu.memory_space<vmem>>, vector<1x64xi32>
    %c0_23 = arith.constant 0 : index
    %c0_24 = arith.constant 0 : index
    %74 = vector.load %arg4[%c0_23, %c0_24] : memref<32x64xf32, #tpu.memory_space<vmem>>, vector<32x64xf32>
    %75 = tpu.iota {dimensions = array<i32: 0>} : vector<32x64xi32>
    %c2_i32 = arith.constant 2 : i32
    %76 = vector.broadcast %c2_i32 : i32 to vector<32x64xi32>
    %77 = arith.shrui %75, %76 : vector<32x64xi32>
    %c3_i32 = arith.constant 3 : i32
    %78 = vector.broadcast %c3_i32 : i32 to vector<32x64xi32>
    %79 = arith.andi %75, %78 : vector<32x64xi32>
    %80 = vector.broadcast %73 : vector<1x64xi32> to vector<32x64xi32>
    %81 = arith.cmpi eq, %77, %80 : vector<32x64xi32>
    %82 = arith.extui %81 : vector<32x64xi1> to vector<32x64xi32>
    %83 = arith.sitofp %82 : vector<32x64xi32> to vector<32x64xf32>
    %c0_25 = arith.constant 0 : index
    %c0_26 = arith.constant 0 : index
    %84 = vector.load %arg5[%c0_25, %c0_26] : memref<4x64xf32, #tpu.memory_space<vmem>>, vector<4x64xf32>
    %cst_27 = arith.constant 0.000000e+00 : f32
    %85 = vector.broadcast %cst_27 : f32 to vector<32x64xf32>
    %c0_i32_28 = arith.constant 0 : i32
    %86 = vector.broadcast %c0_i32_28 : i32 to vector<32x64xi32>
    %87 = arith.cmpi eq, %79, %86 : vector<32x64xi32>
    %88 = arith.extui %87 : vector<32x64xi1> to vector<32x64xi32>
    %89 = arith.sitofp %88 : vector<32x64xi32> to vector<32x64xf32>
    %90 = vector.extract_strided_slice %84 {offsets = [0, 0], sizes = [1, 64], strides = [1, 1]} : vector<4x64xf32> to vector<1x64xf32>
    %91 = vector.broadcast %90 : vector<1x64xf32> to vector<32x64xf32>
    %92 = arith.mulf %89, %91 : vector<32x64xf32>
    %93 = arith.addf %85, %92 : vector<32x64xf32>
    %c1_i32 = arith.constant 1 : i32
    %94 = vector.broadcast %c1_i32 : i32 to vector<32x64xi32>
    %95 = arith.cmpi eq, %79, %94 : vector<32x64xi32>
    %96 = arith.extui %95 : vector<32x64xi1> to vector<32x64xi32>
    %97 = arith.sitofp %96 : vector<32x64xi32> to vector<32x64xf32>
    %98 = vector.extract_strided_slice %84 {offsets = [1, 0], sizes = [1, 64], strides = [1, 1]} : vector<4x64xf32> to vector<1x64xf32>
    %99 = vector.broadcast %98 : vector<1x64xf32> to vector<32x64xf32>
    %100 = arith.mulf %97, %99 : vector<32x64xf32>
    %101 = arith.addf %93, %100 : vector<32x64xf32>
    %c2_i32_29 = arith.constant 2 : i32
    %102 = vector.broadcast %c2_i32_29 : i32 to vector<32x64xi32>
    %103 = arith.cmpi eq, %79, %102 : vector<32x64xi32>
    %104 = arith.extui %103 : vector<32x64xi1> to vector<32x64xi32>
    %105 = arith.sitofp %104 : vector<32x64xi32> to vector<32x64xf32>
    %106 = vector.extract_strided_slice %84 {offsets = [2, 0], sizes = [1, 64], strides = [1, 1]} : vector<4x64xf32> to vector<1x64xf32>
    %107 = vector.broadcast %106 : vector<1x64xf32> to vector<32x64xf32>
    %108 = arith.mulf %105, %107 : vector<32x64xf32>
    %109 = arith.addf %101, %108 : vector<32x64xf32>
    %c3_i32_30 = arith.constant 3 : i32
    %110 = vector.broadcast %c3_i32_30 : i32 to vector<32x64xi32>
    %111 = arith.cmpi eq, %79, %110 : vector<32x64xi32>
    %112 = arith.extui %111 : vector<32x64xi1> to vector<32x64xi32>
    %113 = arith.sitofp %112 : vector<32x64xi32> to vector<32x64xf32>
    %114 = vector.extract_strided_slice %84 {offsets = [3, 0], sizes = [1, 64], strides = [1, 1]} : vector<4x64xf32> to vector<1x64xf32>
    %115 = vector.broadcast %114 : vector<1x64xf32> to vector<32x64xf32>
    %116 = arith.mulf %113, %115 : vector<32x64xf32>
    %117 = arith.addf %109, %116 : vector<32x64xf32>
    %c0_i32_31 = arith.constant 0 : i32
    %118 = vector.broadcast %c0_i32_31 : i32 to vector<1x64xi32>
    %119 = arith.cmpi sgt, %73, %118 : vector<1x64xi32>
    %120 = arith.extui %119 : vector<1x64xi1> to vector<1x64xi32>
    %121 = arith.sitofp %120 : vector<1x64xi32> to vector<1x64xf32>
    %122 = vector.broadcast %121 : vector<1x64xf32> to vector<32x64xf32>
    %123 = arith.mulf %83, %122 : vector<32x64xf32>
    %124 = arith.subf %74, %117 : vector<32x64xf32>
    %125 = arith.mulf %123, %124 : vector<32x64xf32>
    %c0_i32_32 = arith.constant 0 : i32
    %126 = vector.broadcast %c0_i32_32 : i32 to vector<1x64xi32>
    %127 = arith.cmpi sge, %73, %126 : vector<1x64xi32>
    %128 = arith.extui %127 : vector<1x64xi1> to vector<1x64xi32>
    %129 = arith.sitofp %128 : vector<1x64xi32> to vector<1x64xf32>
    %130 = vector.shape_cast %129 : vector<1x64xf32> to vector<1x1x64xf32>
    %cst_33 = arith.constant dense<0.000000e+00> : vector<1xf32>
    %131 = vector.multi_reduction <add>, %130, %cst_33 [1, 2] : vector<1x1x64xf32> to vector<1xf32>
    %132 = vector.shape_cast %131 : vector<1xf32> to vector<1x1x1xf32>
    %133 = vector.extract %132[0, 0, 0] : f32 from vector<1x1x1xf32>
    %134 = math.absf %125 : vector<32x64xf32>
    %cst_34 = arith.constant 1.000000e+00 : f32
    %135 = vector.broadcast %cst_34 : f32 to vector<32x64xf32>
    %136 = arith.cmpf olt, %134, %135 : vector<32x64xf32>
    %137 = arith.extui %136 : vector<32x64xi1> to vector<32x64xi32>
    %138 = arith.sitofp %137 : vector<32x64xi32> to vector<32x64xf32>
    %cst_35 = arith.constant 5.000000e-01 : f32
    %139 = vector.broadcast %cst_35 : f32 to vector<32x64xf32>
    %140 = arith.mulf %138, %139 : vector<32x64xf32>
    %141 = arith.mulf %140, %125 : vector<32x64xf32>
    %142 = arith.mulf %141, %125 : vector<32x64xf32>
    %cst_36 = arith.constant 1.000000e+00 : f32
    %143 = vector.broadcast %cst_36 : f32 to vector<32x64xf32>
    %144 = arith.subf %143, %138 : vector<32x64xf32>
    %cst_37 = arith.constant 5.000000e-01 : f32
    %145 = vector.broadcast %cst_37 : f32 to vector<32x64xf32>
    %146 = arith.subf %134, %145 : vector<32x64xf32>
    %147 = arith.mulf %144, %146 : vector<32x64xf32>
    %148 = arith.addf %142, %147 : vector<32x64xf32>
    %149 = vector.shape_cast %148 : vector<32x64xf32> to vector<1x32x64xf32>
    %cst_38 = arith.constant dense<0.000000e+00> : vector<1xf32>
    %150 = vector.multi_reduction <add>, %149, %cst_38 [1, 2] : vector<1x32x64xf32> to vector<1xf32>
    %151 = vector.shape_cast %150 : vector<1xf32> to vector<1x1x1xf32>
    %152 = vector.extract %151[0, 0, 0] : f32 from vector<1x1x1xf32>
    %cst_39 = arith.constant 1.000000e+00 : f32
    %153 = arith.maximumf %133, %cst_39 : f32
    %154 = arith.divf %152, %153 : f32
    %c0_40 = arith.constant 0 : index
    %c0_41 = arith.constant 0 : index
    %155 = vector.load %arg7[%c0_40, %c0_41] : memref<8x64xf32, #tpu.memory_space<vmem>>, vector<8x64xf32>
    %cst_42 = arith.constant dense<0xFF800000> : vector<64xf32>
    %156 = vector.multi_reduction <maximumf>, %155, %cst_42 [0] : vector<8x64xf32> to vector<64xf32>
    %157 = vector.shape_cast %156 : vector<64xf32> to vector<1x64xf32>
    %158 = vector.broadcast %157 : vector<1x64xf32> to vector<8x64xf32>
    %159 = arith.subf %155, %158 : vector<8x64xf32>
    %160 = math.exp %159 : vector<8x64xf32>
    %cst_43 = arith.constant dense<0.000000e+00> : vector<64xf32>
    %161 = vector.multi_reduction <add>, %160, %cst_43 [0] : vector<8x64xf32> to vector<64xf32>
    %162 = vector.shape_cast %161 : vector<64xf32> to vector<1x64xf32>
    %163 = math.log %162 : vector<1x64xf32>
    %164 = arith.addf %157, %163 : vector<1x64xf32>
    %165 = tpu.iota {dimensions = array<i32: 0>} : vector<8x64xi32>
    %166 = vector.broadcast %73 : vector<1x64xi32> to vector<8x64xi32>
    %167 = arith.cmpi eq, %165, %166 : vector<8x64xi32>
    %168 = arith.extui %167 : vector<8x64xi1> to vector<8x64xi32>
    %169 = arith.sitofp %168 : vector<8x64xi32> to vector<8x64xf32>
    %170 = arith.mulf %169, %155 : vector<8x64xf32>
    %cst_44 = arith.constant dense<0.000000e+00> : vector<64xf32>
    %171 = vector.multi_reduction <add>, %170, %cst_44 [0] : vector<8x64xf32> to vector<64xf32>
    %172 = vector.shape_cast %171 : vector<64xf32> to vector<1x64xf32>
    %c0_i32_45 = arith.constant 0 : i32
    %173 = vector.broadcast %c0_i32_45 : i32 to vector<1x64xi32>
    %174 = arith.cmpi sge, %73, %173 : vector<1x64xi32>
    %175 = arith.extui %174 : vector<1x64xi1> to vector<1x64xi32>
    %176 = arith.sitofp %175 : vector<1x64xi32> to vector<1x64xf32>
    %177 = arith.subf %164, %172 : vector<1x64xf32>
    %178 = arith.mulf %177, %176 : vector<1x64xf32>
    %179 = vector.shape_cast %178 : vector<1x64xf32> to vector<1x1x64xf32>
    %cst_46 = arith.constant dense<0.000000e+00> : vector<1xf32>
    %180 = vector.multi_reduction <add>, %179, %cst_46 [1, 2] : vector<1x1x64xf32> to vector<1xf32>
    %181 = vector.shape_cast %180 : vector<1xf32> to vector<1x1x1xf32>
    %182 = vector.extract %181[0, 0, 0] : f32 from vector<1x1x1xf32>
    %183 = vector.shape_cast %176 : vector<1x64xf32> to vector<1x1x64xf32>
    %cst_47 = arith.constant dense<0.000000e+00> : vector<1xf32>
    %184 = vector.multi_reduction <add>, %183, %cst_47 [1, 2] : vector<1x1x64xf32> to vector<1xf32>
    %185 = vector.shape_cast %184 : vector<1xf32> to vector<1x1x1xf32>
    %186 = vector.extract %185[0, 0, 0] : f32 from vector<1x1x1xf32>
    %cst_48 = arith.constant 1.000000e+00 : f32
    %187 = arith.maximumf %186, %cst_48 : f32
    %188 = arith.divf %182, %187 : f32
    %c0_49 = arith.constant 0 : index
    %189 = memref.load %arg8[%c0_49] : memref<5xf32, #tpu.memory_space<smem>>
    memref.store %38, %arg8[%c0_49] : memref<5xf32, #tpu.memory_space<smem>>
    %c1 = arith.constant 1 : index
    %190 = memref.load %arg8[%c1] : memref<5xf32, #tpu.memory_space<smem>>
    memref.store %72, %arg8[%c1] : memref<5xf32, #tpu.memory_space<smem>>
    %c2 = arith.constant 2 : index
    %191 = memref.load %arg8[%c2] : memref<5xf32, #tpu.memory_space<smem>>
    memref.store %154, %arg8[%c2] : memref<5xf32, #tpu.memory_space<smem>>
    %c3 = arith.constant 3 : index
    %192 = memref.load %arg8[%c3] : memref<5xf32, #tpu.memory_space<smem>>
    memref.store %188, %arg8[%c3] : memref<5xf32, #tpu.memory_space<smem>>
    %193 = arith.addf %38, %72 : f32
    %194 = arith.addf %193, %154 : f32
    %195 = arith.addf %194, %188 : f32
    %c4 = arith.constant 4 : index
    %196 = memref.load %arg8[%c4] : memref<5xf32, #tpu.memory_space<smem>>
    memref.store %195, %arg8[%c4] : memref<5xf32, #tpu.memory_space<smem>>
    return
  }
}

</mosaic_0001>

<llo_original>
// kernel: faster_rcnn_trainer_forward.1
$region0: #{faster_rcnn_trainer_forward.1}
  #allocation0 [shape = 'u32[]', space=smem, size = 0x4, offset = 0x4, fixed_abs, tag = 'smem constant byte address 0x4 - core index']
  #allocation1 [shape = 'u32[144,128]{1,0:T(1,128)}', space=vmem, size = 0x12000, scoped, tag = 'internal scratch']
  %s0 = inlined_call_operand.vmem [shape: f32[4,256], index: 0, kind: input, shape index: {}]
  %s1 = inlined_call_operand.vmem [shape: f32[4,256], index: 1, kind: input, shape index: {}]
  %s2 = inlined_call_operand.hbm [shape: s32[1,256], index: 2, kind: input, shape index: {}]
  %s3 = inlined_call_operand.hbm [shape: f32[2,256], index: 3, kind: input, shape index: {}]
  %s4 = inlined_call_operand.hbm [shape: f32[32,64], index: 4, kind: input, shape index: {}]
  %s5 = inlined_call_operand.vmem [shape: f32[4,64], index: 5, kind: input, shape index: {}]
  %s6 = inlined_call_operand.vmem [shape: s32[1,64], index: 6, kind: input, shape index: {}]
  %s7 = inlined_call_operand.hbm [shape: f32[8,64], index: 7, kind: input, shape index: {}]
  %s8 = inlined_call_operand.vmem [shape: f32[5], index: 8, kind: output, shape index: {}]
  %s9 = sld [smem:[#allocation0]]
  $region58: #{faster_rcnn_trainer_forward.1} parent=0
    _
  %s11 = ssub.s32 1, %s9
  %s12 = scalar_select 0, %s11, %s9
  $region1: #{faster_rcnn_trainer_forward.1} parent=0
    #allocation2 [shape = 'u8[1024]{0}', space=vmem, size = 0x400, scoped, tag = 'input window, operand 2, single buffered']
    #allocation3 [shape = 's32[1]{0}', space=sflag, size = 0x4, scoped, tag = 'scoped memory for faster_rcnn_trainer_forward.1']
    #allocation4 [shape = 's32[1]{0}', space=sflag, size = 0x4, scoped, tag = 'scoped memory for faster_rcnn_trainer_forward.1']
    #allocation5 [shape = 'u8[2048]{0}', space=vmem, size = 0x800, scoped, tag = 'input window, operand 3, single buffered']
    #allocation6 [shape = 's32[1]{0}', space=sflag, size = 0x4, scoped, tag = 'scoped memory for faster_rcnn_trainer_forward.1']
    #allocation7 [shape = 'u8[16384]{0}', space=vmem, size = 0x4000, scoped, tag = 'input window, operand 4, single buffered']
    #allocation8 [shape = 'u8[4096]{0}', space=vmem, size = 0x1000, scoped, tag = 'input window, operand 7, single buffered']
    #allocation9 [shape = 's32[1]{0}', space=sflag, size = 0x4, scoped, tag = 'scoped memory for faster_rcnn_trainer_forward.1']
    #allocation10 [shape = 'u8[512]{0}', space=smem, size = 0x200, scoped, tag = 'output window, operand 0, single buffered']
    %13 = vsyncpa [#allocation3], 0
    %14 = vsyncpa [#allocation6], 0
    %15 = vsyncpa [#allocation9], 0
    %16 = vsyncpa [#allocation4], 0
    // Predicated region
    $region2: #{faster_rcnn_trainer_forward.1} parent=1 // pred_check
      _
    $region3: #{faster_rcnn_trainer_forward.1} parent=1 // pred_check_branch
      %18 = sbr.rel (0) target = $region5
    $region4: #{faster_rcnn_trainer_forward.1} parent=1 // pred_region
      _
    $region5: #{faster_rcnn_trainer_forward.1} parent=1 // pred_fallthru
      _
    // Predicated region
    $region6: #{faster_rcnn_trainer_forward.1} parent=1 // pred_check
      _
    $region7: #{faster_rcnn_trainer_forward.1} parent=1 // pred_check_branch
      %20 = sbr.rel (0) target = $region9
    $region8: #{faster_rcnn_trainer_forward.1} parent=1 // pred_region
      _
    $region9: #{faster_rcnn_trainer_forward.1} parent=1 // pred_fallthru
      _
    // Predicated region
    $region10: #{faster_rcnn_trainer_forward.1} parent=1 // pred_check
      _
    $region11: #{faster_rcnn_trainer_forward.1} parent=1 // pred_check_branch
      %22 = sbr.rel (0) target = $region13
    $region12: #{faster_rcnn_trainer_forward.1} parent=1 // pred_region
      %s24 = ssub.s32 32, 32
      %25 = vsyncadd [#allocation3], %s24
      %s27 = sshll.u32 [#allocation2], 4
      %s28 = int_to_ptr.vmem [resolvable:$true] %s27
      %30 = dma.hbm_to_vmem [thread:$0]  %s2, 32, %s28, [#allocation3]
    $region13: #{faster_rcnn_trainer_forward.1} parent=1 // pred_fallthru
      _
    // Predicated region
    $region14: #{faster_rcnn_trainer_forward.1} parent=1 // pred_check
      _
    $region15: #{faster_rcnn_trainer_forward.1} parent=1 // pred_check_branch
      %32 = sbr.rel (0) target = $region17
    $region16: #{faster_rcnn_trainer_forward.1} parent=1 // pred_region
      %s34 = ssub.s32 64, 64
      %35 = vsyncadd [#allocation6], %s34
      %s37 = sshll.u32 [#allocation5], 4
      %s38 = int_to_ptr.vmem [resolvable:$true] %s37
      %40 = dma.hbm_to_vmem [thread:$0]  %s3, 64, %s38, [#allocation6]
    $region17: #{faster_rcnn_trainer_forward.1} parent=1 // pred_fallthru
      _
    // Predicated region
    $region18: #{faster_rcnn_trainer_forward.1} parent=1 // pred_check
      _
    $region19: #{faster_rcnn_trainer_forward.1} parent=1 // pred_check_branch
      %42 = sbr.rel (0) target = $region21
    $region20: #{faster_rcnn_trainer_forward.1} parent=1 // pred_region
      %s44 = ssub.s32 512, 512
      %45 = vsyncadd [#allocation6], %s44
      %s46 = sshll.u32 [#allocation7], 4
      %s47 = int_to_ptr.vmem [resolvable:$true] %s46
      %52 = dma.hbm_to_vmem [thread:$0]  %s4, 512, %s47, [#allocation6], 128, 128, 8
    $region21: #{faster_rcnn_trainer_forward.1} parent=1 // pred_fallthru
      _
    // Predicated region
    $region22: #{faster_rcnn_trainer_forward.1} parent=1 // pred_check
      _
    $region23: #{faster_rcnn_trainer_forward.1} parent=1 // pred_check_branch
      %54 = sbr.rel (0) target = $region25
    $region24: #{faster_rcnn_trainer_forward.1} parent=1 // pred_region
      _
    $region25: #{faster_rcnn_trainer_forward.1} parent=1 // pred_fallthru
      _
    // Predicated region
    $region26: #{faster_rcnn_trainer_forward.1} parent=1 // pred_check
      _
    $region27: #{faster_rcnn_trainer_forward.1} parent=1 // pred_check_branch
      %56 = sbr.rel (0) target = $region29
    $region28: #{faster_rcnn_trainer_forward.1} parent=1 // pred_region
      _
    $region29: #{faster_rcnn_trainer_forward.1} parent=1 // pred_fallthru
      _
    // Predicated region
    $region30: #{faster_rcnn_trainer_forward.1} parent=1 // pred_check
      _
    $region31: #{faster_rcnn_trainer_forward.1} parent=1 // pred_check_branch
      %58 = sbr.rel (0) target = $region33
    $region32: #{faster_rcnn_trainer_forward.1} parent=1 // pred_region
      %s60 = ssub.s32 128, 128
      %61 = vsyncadd [#allocation9], %s60
      %s63 = sshll.u32 [#allocation8], 4
      %s64 = int_to_ptr.vmem [resolvable:$true] %s63
      %66 = dma.hbm_to_vmem [thread:$0]  %s7, 128, %s64, [#allocation9]
    $region33: #{faster_rcnn_trainer_forward.1} parent=1 // pred_fallthru
      _
    // Predicated region
    $region34: #{faster_rcnn_trainer_forward.1} parent=1 // pred_check
      _
    $region35: #{faster_rcnn_trainer_forward.1} parent=1 // pred_check_branch
      %68 = sbr.rel (0) target = $region37
    $region36: #{faster_rcnn_trainer_forward.1} parent=1 // pred_region
      %69 = dma.done [#allocation3], 32
    $region37: #{faster_rcnn_trainer_forward.1} parent=1 // pred_fallthru
      _
    // Predicated region
    $region38: #{faster_rcnn_trainer_forward.1} parent=1 // pred_check
      _
    $region39: #{faster_rcnn_trainer_forward.1} parent=1 // pred_check_branch
      %71 = sbr.rel (0) target = $region41
    $region40: #{faster_rcnn_trainer_forward.1} parent=1 // pred_region
      %72 = dma.done [#allocation6], 64
    $region41: #{faster_rcnn_trainer_forward.1} parent=1 // pred_fallthru
      _
    // Predicated region
    $region42: #{faster_rcnn_trainer_forward.1} parent=1 // pred_check
      _
    $region43: #{faster_rcnn_trainer_forward.1} parent=1 // pred_check_branch
      %74 = sbr.rel (0) target = $region45
    $region44: #{faster_rcnn_trainer_forward.1} parent=1 // pred_region
      %75 = dma.done [#allocation6], 512
    $region45: #{faster_rcnn_trainer_forward.1} parent=1 // pred_fallthru
      _
    // Predicated region
    $region46: #{faster_rcnn_trainer_forward.1} parent=1 // pred_check
      _
    $region47: #{faster_rcnn_trainer_forward.1} parent=1 // pred_check_branch
      %77 = sbr.rel (0) target = $region49
    $region48: #{faster_rcnn_trainer_forward.1} parent=1 // pred_region
      %78 = dma.done [#allocation9], 128
    $region49: #{faster_rcnn_trainer_forward.1} parent=1 // pred_fallthru
      _
    %v79 = vld [vmem:[#allocation2] sm:$0x3]
    %vm80 = vcmp.gt.s32.totalorder %v79, 0
    %v81 = vsel %vm80, 1, 0
    %v82 = vcvt.s32.f32 %v81
    %v83 = vld [vmem:[%s0] sm:$0xff]
    %v84 = vld [vmem:[%s1] sm:$0xff]
    %v85 = vsub.f32 %v83, %v84
    %v87 = vlaneseq
    %v88 = vshrl.u32 %v87, 7
    %v89 = vsub.s32 0, %v88
    %v90 = vrot.slane %v82, %v89
    %v91 = vlaneseq
    %v92 = vshrl.u32 %v91, 7
    %v93 = vsub.s32 1, %v92
    %v94 = vrot.slane %v82, %v93
    %v98 = vcombine.high %v85, %v85
    %v100 = vmul.f32 %v90, %v85
    %v101 = vmul.f32 %v94, %v98
    %vm102 = vcmp.ge.s32.totalorder %v79, 0
    %v103 = vsel %vm102, 1, 0
    %v104 = vcvt.s32.f32 %v103
    %v106 = vlaneseq
    %v107 = vshrl.u32 %v106, 7
    %v108 = vsub.s32 0, %v107
    %v109 = vrot.slane %v104, %v108
    %v110 = vlaneseq
    %v111 = vshrl.u32 %v110, 7
    %v112 = vsub.s32 1, %v111
    %v113 = vrot.slane %v104, %v112
    %vm116 = vcmask 1040384
    %v117 = vsel %vm116, %v109, 0.0
    %v118 = vsel %vm116, %v113, 0.0
    %v119 = vadd.f32 %v117, %v118
    %120 = vadd.xlane.f32.xlu0 %v119
    %v121 = vpop.xlane.xlu0 %120
    %v122 = vrot.slane %v121, 4
    %v123 = vadd.f32 %v121, %v122
    %v124 = vrot.slane %v123, 2
    %v125 = vadd.f32 %v123, %v124
    %v126 = vrot.slane %v125, 1
    %v127 = vadd.f32 %v125, %v126
    %s128 = vtos %v127
    %v129 = vand.u32 2147483647, %v100
    %v130 = vand.u32 2147483647, %v101
    %vm131 = vcmp.lt.f32.partialorder %v129, 0.11111111
    %vm132 = vcmp.lt.f32.partialorder %v130, 0.11111111
    %v133 = vsel %vm131, 1, 0
    %v134 = vsel %vm132, 1, 0
    %v135 = vcvt.s32.f32 %v133
    %v136 = vcvt.s32.f32 %v134
    %v137 = vmul.f32 %v135, 4.5
    %v138 = vmul.f32 %v136, 4.5
    %v139 = vmul.f32 %v137, %v100
    %v140 = vmul.f32 %v138, %v101
    %v141 = vmul.f32 %v139, %v100
    %v142 = vmul.f32 %v140, %v101
    %v143 = vsub.f32 1.0, %v135
    %v144 = vsub.f32 1.0, %v136
    %v145 = vsub.f32 %v129, 0.055555556
    %v146 = vsub.f32 %v130, 0.055555556
    %v147 = vmul.f32 %v143, %v145
    %v148 = vmul.f32 %v144, %v146
    %v149 = vadd.f32 %v141, %v147
    %v150 = vadd.f32 %v142, %v148
    %vm151 = vcmask 1043456
    %v152 = vsel %vm151, %v149, 0.0
    %v153 = vsel %vm151, %v150, 0.0
    %v154 = vadd.f32 %v152, %v153
    %155 = vadd.xlane.f32.xlu0 %v154
    %v156 = vpop.xlane.xlu0 %155
    %v157 = vrot.slane %v156, 4
    %v158 = vadd.f32 %v156, %v157
    %v159 = vrot.slane %v158, 2
    %v160 = vadd.f32 %v158, %v159
    %v161 = vrot.slane %v160, 1
    %v162 = vadd.f32 %v160, %v161
    %s163 = vtos %v162
    %s164 = smax.f32 %s128, 1.0
    %v165 = vstv %s164
    %v166 = vrcp.pop %v165
    %s167 = vtos %v166
    %s168 = smul.f32 %s163, %s167
    %v169 = vld [vmem:[#allocation5] sm:$0xf]
    %v172 = vunpack.c.l.s4 1983009808
    %v173 = vunpack.c.0.s8 %v172
    %v174 = vlaneseq
    %v175 = vshrl.u32 %v174, 7
    %v176 = vsub.s32 %v173, %v175
    %v177 = vrot.slane %v169, %v176
    %v178 = vcombine.high %v177, %v177
    %vm181 = vcmask 1041408
    %v182 = vsel %vm181, %v177, -inf
    %v183 = vrot.slane %v182, 4
    %v184 = vmax.f32 %v182, %v183
    %v185 = vrot.slane %v184, 2
    %v186 = vmax.f32 %v184, %v185
    %v187 = vrot.slane %v186, 1
    %v188 = vmax.f32 %v186, %v187
    %v189 = vsel %vm181, %v178, -inf
    %v190 = vrot.slane %v189, 4
    %v191 = vmax.f32 %v189, %v190
    %v192 = vrot.slane %v191, 2
    %v193 = vmax.f32 %v191, %v192
    %v194 = vrot.slane %v193, 1
    %v195 = vmax.f32 %v193, %v194
    %v198 = vcombine.low %v188, %v195
    %v200 = vunpack.c.l.s4 1983009808
    %v201 = vunpack.c.0.s8 %v200
    %v202 = vlaneseq
    %v203 = vshrl.u32 %v202, 7
    %v204 = vsub.s32 %v201, %v203
    %v205 = vrot.slane %v198, %v204
    %v207 = vsub.f32 %v169, %v205
    %v208 = vmul.f32 %v207, 1.442695
    %v209 = vpow.pop %v208
    %v212 = vunpack.c.l.s4 1983009808
    %v213 = vunpack.c.0.s8 %v212
    %v214 = vlaneseq
    %v215 = vshrl.u32 %v214, 7
    %v216 = vsub.s32 %v213, %v215
    %v217 = vrot.slane %v209, %v216
    %v218 = vcombine.high %v217, %v217
    %v221 = vsel %vm181, %v217, 0.0
    %v222 = vrot.slane %v221, 4
    %v223 = vadd.f32 %v221, %v222
    %v224 = vrot.slane %v223, 2
    %v225 = vadd.f32 %v223, %v224
    %v226 = vrot.slane %v225, 1
    %v227 = vadd.f32 %v225, %v226
    %v228 = vsel %vm181, %v218, 0.0
    %v229 = vrot.slane %v228, 4
    %v230 = vadd.f32 %v228, %v229
    %v231 = vrot.slane %v230, 2
    %v232 = vadd.f32 %v230, %v231
    %v233 = vrot.slane %v232, 1
    %v234 = vadd.f32 %v232, %v233
    %v235 = vlog2.pop %v227
    %v236 = vmul.f32 %v235, 0.6931472
    %v237 = vlog2.pop %v234
    %v238 = vmul.f32 %v237, 0.6931472
    %v239 = vadd.f32 %v188, %v236
    %v240 = vadd.f32 %v195, %v238
    %v241 = vlaneseq
    %v242 = vshrl.u32 %v241, 7
    %v243 = vlaneseq
    %v244 = vshrl.u32 %v243, 7
    %v245 = vsub.s32 0, %v244
    %v246 = vrot.slane %v79, %v245
    %v247 = vlaneseq
    %v248 = vshrl.u32 %v247, 7
    %v249 = vsub.s32 1, %v248
    %v250 = vrot.slane %v79, %v249
    %vm251 = vcmp.eq.s32.totalorder %v242, %v246
    %vm252 = vcmp.eq.s32.totalorder %v242, %v250
    %v253 = vsel %vm251, 1, 0
    %v254 = vsel %vm252, 1, 0
    %v255 = vcvt.s32.f32 %v253
    %v256 = vcvt.s32.f32 %v254
    %v257 = vmul.f32 %v255, %v177
    %v258 = vmul.f32 %v256, %v178
    %v259 = vsel %vm181, %v257, 0.0
    %v260 = vrot.slane %v259, 4
    %v261 = vadd.f32 %v259, %v260
    %v262 = vrot.slane %v261, 2
    %v263 = vadd.f32 %v261, %v262
    %v264 = vrot.slane %v263, 1
    %v265 = vadd.f32 %v263, %v264
    %v266 = vsel %vm181, %v258, 0.0
    %v267 = vrot.slane %v266, 4
    %v268 = vadd.f32 %v266, %v267
    %v269 = vrot.slane %v268, 2
    %v270 = vadd.f32 %v268, %v269
    %v271 = vrot.slane %v270, 1
    %v272 = vadd.f32 %v270, %v271
    %v273 = vsub.f32 %v239, %v265
    %v274 = vsub.f32 %v240, %v272
    %v275 = vmul.f32 %v273, %v109
    %v276 = vmul.f32 %v274, %v113
    %v277 = vsel %vm116, %v275, 0.0
    %v278 = vsel %vm116, %v276, 0.0
    %v279 = vadd.f32 %v277, %v278
    %280 = vadd.xlane.f32.xlu0 %v279
    %v281 = vpop.xlane.xlu0 %280
    %v282 = vrot.slane %v281, 4
    %v283 = vadd.f32 %v281, %v282
    %v284 = vrot.slane %v283, 2
    %v285 = vadd.f32 %v283, %v284
    %v286 = vrot.slane %v285, 1
    %v287 = vadd.f32 %v285, %v286
    %s288 = vtos %v287
    %v289 = vstv %s164
    %v290 = vrcp.pop %v289
    %s291 = vtos %v290
    %s292 = smul.f32 %s288, %s291
    %v293 = vld [vmem:[%s6] sm:$0x1]
    %v294 = vld [vmem:[#allocation7] sm:$0xff]
    %v295 = vld [vmem:[#allocation7 + $0x8] sm:$0xff]
    %v296 = vld [vmem:[#allocation7 + $0x10] sm:$0xff]
    %v297 = vld [vmem:[#allocation7 + $0x18] sm:$0xff]
    %v298 = vadd.s32 %v242, 8
    %v299 = vadd.s32 %v242, 16
    %v300 = vadd.s32 %v242, 24
    %v301 = vshrl.u32 %v242, 2
    %v302 = vshrl.u32 %v298, 2
    %v303 = vshrl.u32 %v299, 2
    %v304 = vshrl.u32 %v300, 2
    %v305 = vand.u32 %v242, 3
    %v306 = vand.u32 %v298, 3
    %v307 = vand.u32 %v299, 3
    %v308 = vand.u32 %v300, 3
    %v309 = vlaneseq
    %v310 = vshrl.u32 %v309, 7
    %v311 = vsub.s32 0, %v310
    %v312 = vrot.slane %v293, %v311
    %vm313 = vcmp.eq.s32.totalorder %v301, %v312
    %vm314 = vcmp.eq.s32.totalorder %v302, %v312
    %vm315 = vcmp.eq.s32.totalorder %v303, %v312
    %vm316 = vcmp.eq.s32.totalorder %v304, %v312
    %v317 = vsel %vm313, 1, 0
    %v318 = vsel %vm314, 1, 0
    %v319 = vsel %vm315, 1, 0
    %v320 = vsel %vm316, 1, 0
    %v321 = vcvt.s32.f32 %v317
    %v322 = vcvt.s32.f32 %v318
    %v323 = vcvt.s32.f32 %v319
    %v324 = vcvt.s32.f32 %v320
    %v325 = vld [vmem:[%s5] sm:$0xf]
    %vm326 = vcmp.eq.s32.totalorder %v305, 0
    %vm327 = vcmp.eq.s32.totalorder %v306, 0
    %vm328 = vcmp.eq.s32.totalorder %v307, 0
    %vm329 = vcmp.eq.s32.totalorder %v308, 0
    %v330 = vsel %vm326, 1, 0
    %v331 = vsel %vm327, 1, 0
    %v332 = vsel %vm328, 1, 0
    %v333 = vsel %vm329, 1, 0
    %v334 = vcvt.s32.f32 %v330
    %v335 = vcvt.s32.f32 %v331
    %v336 = vcvt.s32.f32 %v332
    %v337 = vcvt.s32.f32 %v333
    %v338 = vlaneseq
    %v339 = vshrl.u32 %v338, 7
    %v340 = vsub.s32 0, %v339
    %v341 = vrot.slane %v325, %v340
    %v342 = vmul.f32 %v334, %v341
    %v343 = vmul.f32 %v335, %v341
    %v344 = vmul.f32 %v336, %v341
    %v345 = vmul.f32 %v337, %v341
    %v346 = vadd.f32 %v342, 0.0
    %v347 = vadd.f32 %v343, 0.0
    %v348 = vadd.f32 %v344, 0.0
    %v349 = vadd.f32 %v345, 0.0
    %vm350 = vcmp.eq.s32.totalorder %v305, 1
    %vm351 = vcmp.eq.s32.totalorder %v306, 1
    %vm352 = vcmp.eq.s32.totalorder %v307, 1
    %vm353 = vcmp.eq.s32.totalorder %v308, 1
    %v354 = vsel %vm350, 1, 0
    %v355 = vsel %vm351, 1, 0
    %v356 = vsel %vm352, 1, 0
    %v357 = vsel %vm353, 1, 0
    %v358 = vcvt.s32.f32 %v354
    %v359 = vcvt.s32.f32 %v355
    %v360 = vcvt.s32.f32 %v356
    %v361 = vcvt.s32.f32 %v357
    %v362 = vlaneseq
    %v363 = vshrl.u32 %v362, 7
    %v364 = vsub.s32 1, %v363
    %v365 = vrot.slane %v325, %v364
    %v366 = vmul.f32 %v358, %v365
    %v367 = vmul.f32 %v359, %v365
    %v368 = vmul.f32 %v360, %v365
    %v369 = vmul.f32 %v361, %v365
    %v370 = vadd.f32 %v346, %v366
    %v371 = vadd.f32 %v347, %v367
    %v372 = vadd.f32 %v348, %v368
    %v373 = vadd.f32 %v349, %v369
    %vm374 = vcmp.eq.s32.totalorder %v305, 2
    %vm375 = vcmp.eq.s32.totalorder %v306, 2
    %vm376 = vcmp.eq.s32.totalorder %v307, 2
    %vm377 = vcmp.eq.s32.totalorder %v308, 2
    %v378 = vsel %vm374, 1, 0
    %v379 = vsel %vm375, 1, 0
    %v380 = vsel %vm376, 1, 0
    %v381 = vsel %vm377, 1, 0
    %v382 = vcvt.s32.f32 %v378
    %v383 = vcvt.s32.f32 %v379
    %v384 = vcvt.s32.f32 %v380
    %v385 = vcvt.s32.f32 %v381
    %v386 = vlaneseq
    %v387 = vshrl.u32 %v386, 7
    %v388 = vsub.s32 2, %v387
    %v389 = vrot.slane %v325, %v388
    %v390 = vmul.f32 %v382, %v389
    %v391 = vmul.f32 %v383, %v389
    %v392 = vmul.f32 %v384, %v389
    %v393 = vmul.f32 %v385, %v389
    %v394 = vadd.f32 %v370, %v390
    %v395 = vadd.f32 %v371, %v391
    %v396 = vadd.f32 %v372, %v392
    %v397 = vadd.f32 %v373, %v393
    %vm398 = vcmp.eq.s32.totalorder %v305, 3
    %vm399 = vcmp.eq.s32.totalorder %v306, 3
    %vm400 = vcmp.eq.s32.totalorder %v307, 3
    %vm401 = vcmp.eq.s32.totalorder %v308, 3
    %v402 = vsel %vm398, 1, 0
    %v403 = vsel %vm399, 1, 0
    %v404 = vsel %vm400, 1, 0
    %v405 = vsel %vm401, 1, 0
    %v406 = vcvt.s32.f32 %v402
    %v407 = vcvt.s32.f32 %v403
    %v408 = vcvt.s32.f32 %v404
    %v409 = vcvt.s32.f32 %v405
    %v410 = vlaneseq
    %v411 = vshrl.u32 %v410, 7
    %v412 = vsub.s32 3, %v411
    %v413 = vrot.slane %v325, %v412
    %v414 = vmul.f32 %v406, %v413
    %v415 = vmul.f32 %v407, %v413
    %v416 = vmul.f32 %v408, %v413
    %v417 = vmul.f32 %v409, %v413
    %v418 = vadd.f32 %v394, %v414
    %v419 = vadd.f32 %v395, %v415
    %v420 = vadd.f32 %v396, %v416
    %v421 = vadd.f32 %v397, %v417
    %vm422 = vcmp.gt.s32.totalorder %v293, 0
    %v423 = vsel %vm422, 1, 0
    %v424 = vcvt.s32.f32 %v423
    %v426 = vlaneseq
    %v427 = vshrl.u32 %v426, 7
    %v428 = vsub.s32 0, %v427
    %v429 = vrot.slane %v424, %v428
    %v431 = vmul.f32 %v321, %v429
    %v432 = vmul.f32 %v322, %v429
    %v433 = vmul.f32 %v323, %v429
    %v434 = vmul.f32 %v324, %v429
    %v435 = vsub.f32 %v294, %v418
    %v436 = vsub.f32 %v295, %v419
    %v437 = vsub.f32 %v296, %v420
    %v438 = vsub.f32 %v297, %v421
    %v439 = vmul.f32 %v431, %v435
    %v440 = vmul.f32 %v432, %v436
    %v441 = vmul.f32 %v433, %v437
    %v442 = vmul.f32 %v434, %v438
    %vm443 = vcmp.ge.s32.totalorder %v293, 0
    %v444 = vsel %vm443, 1, 0
    %v445 = vcvt.s32.f32 %v444
    %vm446 = vcmask 516096
    %v447 = vsel %vm446, %v445, 0.0
    %448 = vadd.xlane.f32.xlu0 %v447
    %v449 = vpop.xlane.xlu0 %448
    %v450 = vrot.slane %v449, 4
    %v451 = vadd.f32 %v449, %v450
    %v452 = vrot.slane %v451, 2
    %v453 = vadd.f32 %v451, %v452
    %v454 = vrot.slane %v453, 1
    %v455 = vadd.f32 %v453, %v454
    %s456 = vtos %v455
    %v457 = vand.u32 2147483647, %v439
    %v458 = vand.u32 2147483647, %v440
    %v459 = vand.u32 2147483647, %v441
    %v460 = vand.u32 2147483647, %v442
    %vm461 = vcmp.lt.f32.partialorder %v457, 1.0
    %vm462 = vcmp.lt.f32.partialorder %v458, 1.0
    %vm463 = vcmp.lt.f32.partialorder %v459, 1.0
    %vm464 = vcmp.lt.f32.partialorder %v460, 1.0
    %v465 = vsel %vm461, 1, 0
    %v466 = vsel %vm462, 1, 0
    %v467 = vsel %vm463, 1, 0
    %v468 = vsel %vm464, 1, 0
    %v469 = vcvt.s32.f32 %v465
    %v470 = vcvt.s32.f32 %v466
    %v471 = vcvt.s32.f32 %v467
    %v472 = vcvt.s32.f32 %v468
    %v473 = vmul.f32 %v469, 0.5
    %v474 = vmul.f32 %v470, 0.5
    %v475 = vmul.f32 %v471, 0.5
    %v476 = vmul.f32 %v472, 0.5
    %v477 = vmul.f32 %v473, %v439
    %v478 = vmul.f32 %v474, %v440
    %v479 = vmul.f32 %v475, %v441
    %v480 = vmul.f32 %v476, %v442
    %v481 = vmul.f32 %v477, %v439
    %v482 = vmul.f32 %v478, %v440
    %v483 = vmul.f32 %v479, %v441
    %v484 = vmul.f32 %v480, %v442
    %v485 = vsub.f32 1.0, %v469
    %v486 = vsub.f32 1.0, %v470
    %v487 = vsub.f32 1.0, %v471
    %v488 = vsub.f32 1.0, %v472
    %v489 = vsub.f32 %v457, 0.5
    %v490 = vsub.f32 %v458, 0.5
    %v491 = vsub.f32 %v459, 0.5
    %v492 = vsub.f32 %v460, 0.5
    %v493 = vmul.f32 %v485, %v489
    %v494 = vmul.f32 %v486, %v490
    %v495 = vmul.f32 %v487, %v491
    %v496 = vmul.f32 %v488, %v492
    %v497 = vadd.f32 %v481, %v493
    %v498 = vadd.f32 %v482, %v494
    %v499 = vadd.f32 %v483, %v495
    %v500 = vadd.f32 %v484, %v496
    %vm501 = vcmask 523264
    %v502 = vsel %vm501, %v497, 0.0
    %v503 = vsel %vm501, %v498, 0.0
    %v504 = vadd.f32 %v502, %v503
    %v505 = vsel %vm501, %v499, 0.0
    %v506 = vadd.f32 %v504, %v505
    %v507 = vsel %vm501, %v500, 0.0
    %v508 = vadd.f32 %v506, %v507
    %509 = vadd.xlane.f32.xlu0 %v508
    %v510 = vpop.xlane.xlu0 %509
    %v511 = vrot.slane %v510, 4
    %v512 = vadd.f32 %v510, %v511
    %v513 = vrot.slane %v512, 2
    %v514 = vadd.f32 %v512, %v513
    %v515 = vrot.slane %v514, 1
    %v516 = vadd.f32 %v514, %v515
    %s517 = vtos %v516
    %s518 = smax.f32 %s456, 1.0
    %v519 = vstv %s518
    %v520 = vrcp.pop %v519
    %s521 = vtos %v520
    %s522 = smul.f32 %s517, %s521
    %v523 = vld [vmem:[#allocation8] sm:$0xff]
    %v524 = vsel %vm501, %v523, -inf
    %v525 = vrot.slane %v524, 4
    %v526 = vmax.f32 %v524, %v525
    %v527 = vrot.slane %v526, 2
    %v528 = vmax.f32 %v526, %v527
    %v529 = vrot.slane %v528, 1
    %v530 = vmax.f32 %v528, %v529
    %v531 = vsub.f32 %v523, %v530
    %v532 = vmul.f32 %v531, 1.442695
    %v533 = vpow.pop %v532
    %v534 = vsel %vm501, %v533, 0.0
    %v535 = vrot.slane %v534, 4
    %v536 = vadd.f32 %v534, %v535
    %v537 = vrot.slane %v536, 2
    %v538 = vadd.f32 %v536, %v537
    %v539 = vrot.slane %v538, 1
    %v540 = vadd.f32 %v538, %v539
    %v541 = vlog2.pop %v540
    %v542 = vmul.f32 %v541, 0.6931472
    %v543 = vadd.f32 %v530, %v542
    %vm544 = vcmp.eq.s32.totalorder %v242, %v312
    %v545 = vsel %vm544, 1, 0
    %v546 = vcvt.s32.f32 %v545
    %v547 = vmul.f32 %v546, %v523
    %v548 = vsel %vm501, %v547, 0.0
    %v549 = vrot.slane %v548, 4
    %v550 = vadd.f32 %v548, %v549
    %v551 = vrot.slane %v550, 2
    %v552 = vadd.f32 %v550, %v551
    %v553 = vrot.slane %v552, 1
    %v554 = vadd.f32 %v552, %v553
    %v555 = vsub.f32 %v543, %v554
    %v556 = vmul.f32 %v555, %v445
    %v557 = vsel %vm446, %v556, 0.0
    %558 = vadd.xlane.f32.xlu0 %v557
    %v559 = vpop.xlane.xlu0 %558
    %v560 = vrot.slane %v559, 4
    %v561 = vadd.f32 %v559, %v560
    %v562 = vrot.slane %v561, 2
    %v563 = vadd.f32 %v561, %v562
    %v564 = vrot.slane %v563, 1
    %v565 = vadd.f32 %v563, %v564
    %s566 = vtos %v565
    %v567 = vstv %s518
    %v568 = vrcp.pop %v567
    %s569 = vtos %v568
    %s570 = smul.f32 %s566, %s569
    %s571 = scalar_lea.smem [#allocation10], 0
    %572 = sst [smem:[%s571]] %s168
    %s573 = scalar_lea.smem [#allocation10], 1
    %574 = sst [smem:[%s573]] %s292
    %s575 = scalar_lea.smem [#allocation10], 2
    %576 = sst [smem:[%s575]] %s522
    %s577 = scalar_lea.smem [#allocation10], 3
    %578 = sst [smem:[%s577]] %s570
    %s579 = sadd.f32 %s168, %s292
    %s580 = sadd.f32 %s579, %s522
    %s581 = sadd.f32 %s580, %s570
    %s582 = scalar_lea.smem [#allocation10], 4
    %583 = sst [smem:[%s582]] %s581
    // Predicated region
    $region50: #{faster_rcnn_trainer_forward.1} parent=1 // pred_check
      _
    $region51: #{faster_rcnn_trainer_forward.1} parent=1 // pred_check_branch
      %585 = sbr.rel (0) target = $region53
    $region52: #{faster_rcnn_trainer_forward.1} parent=1 // pred_region
      %s587 = ssub.s32 16, 16
      %588 = vsyncadd [#allocation4], %s587
      %s590 = sshll.u32 %s8, 4
      %s591 = int_to_ptr.vmem [resolvable:$true] %s590
      %593 = dma.smem_to_vmem [#allocation10], 16, %s591, [#allocation4]
    $region53: #{faster_rcnn_trainer_forward.1} parent=1 // pred_fallthru
      _
    // Predicated region
    $region54: #{faster_rcnn_trainer_forward.1} parent=1 // pred_check
      _
    $region55: #{faster_rcnn_trainer_forward.1} parent=1 // pred_check_branch
      %595 = sbr.rel (0) target = $region57
    $region56: #{faster_rcnn_trainer_forward.1} parent=1 // pred_region
      %596 = dma.done [#allocation4], 16
    $region57: #{faster_rcnn_trainer_forward.1} parent=1 // pred_fallthru
      _
    %597 = sfence
    %598 = vsyncpa [#allocation3], 1
    %599 = vsyncpa [#allocation6], 1
    %600 = vsyncpa [#allocation9], 1
    %601 = vsyncpa [#allocation4], 1

</llo_original>
